<compile_context>
chip_gen: v6e
topology: v6e:2x2x1
jax: 0.10.0
libtpu: 0.0.40
codegen_flags: <defaults>
</compile_context>

<pallas_src>
import functools

import jax
import jax.numpy as jnp
from jax.experimental import pallas as pl
from jax.experimental.pallas import tpu as pltpu


def _spatial_gather_kernel(p_ref, f_ref, o_ref, p_scr, *, scale, approx_recip):
    """One (batch, C-tile) grid step.

    p_ref : (1, K, HW)     class logits (block index constant over the C axis)
    f_ref : (1, C_BLK, HW) feats tile in natural NCHW-flattened layout
    o_ref : (1, C_BLK, K)  ocr_context tile, already in 'b c k' order
    p_scr : (K, HW)        softmax(probs) cached for the whole batch element
    """
    # Spatial softmax: computed once per batch element (first C tile only),
    # then reused by every feats tile via the VMEM scratch.
    @pl.when(pl.program_id(1) == 0)
    def _():
        logits = p_ref[0].astype(jnp.float32)            # (K, HW)
        if scale != 1.0:
            logits = logits * scale
        m = jnp.max(logits, axis=-1, keepdims=True)
        e = jnp.exp(logits - m)
        s = jnp.sum(e, axis=-1, keepdims=True)           # (K, 1)
        inv = pl.reciprocal(s, approx=approx_recip)      # cheap: K scalars, EUP
        p_scr[...] = (e * inv).astype(p_scr.dtype)

    p = p_scr[...]                                       # (K, HW) in matmul dtype
    f = f_ref[0]                                         # (C_BLK, HW)
    if f.dtype != p.dtype:                               # cast only when needed
        f = f.astype(p.dtype)
    # feats (C_BLK, HW) contracted with probs (K, HW) over HW  ==  feats @ probs^T
    # -> (C_BLK, K): exactly the module's 'b c k' layout, f32 accumulation on MXU.
    ctx = jax.lax.dot_general(
        f, p,
        dimension_numbers=(((1,), (1,)), ((), ())),
        preferred_element_type=jnp.float32)
    o_ref[0] = ctx.astype(o_ref.dtype)


def _vmem_capacity_bytes():
    """Physical VMEM of the local TPU generation (conservative fallback)."""
    try:
        info = pltpu.get_tpu_info()
        for attr in ("vmem_capacity_bytes", "vmem_bytes"):
            cap = getattr(info, attr, None)
            if cap:
                return int(cap)
    except Exception:
        pass
    return 64 << 20  # v7x has the smallest physical VMEM — safe everywhere


def _choose_c_block(C, HW, feats_itemsize, feats_budget_bytes):
    """Largest C tile whose double-buffered feats block fits the budget.

    Returns (c_blk, c_padded): c_padded is C rounded up to a multiple of c_blk so
    ragged C never falls back to an unbudgeted full-C block.
    """
    per_row = 2 * HW * feats_itemsize            # double-buffered bytes / channel
    if C * per_row <= feats_budget_bytes:
        return C, C                              # full C fits: single tile, no pad
    c_blk = (feats_budget_bytes // per_row) // 8 * 8
    c_blk = int(max(8, min(c_blk, C)))
    c_pad = int(pl.cdiv(C, c_blk)) * c_blk
    return c_blk, c_pad


def spatial_gather(feats_nchw, probs_nchw, scale=1.0):
    """SpatialGather_Module.forward: (B,C,H,W), (B,K,H,W) -> (B,C,K) float32."""
    B, C, H, W = feats_nchw.shape
    Bp, K, Hp, Wp = probs_nchw.shape
    assert (B, H, W) == (Bp, Hp, Wp), "feats/probs spatial or batch mismatch"
    HW = H * W

    # Static scale folds into the kernel; a traced scale is applied to the small
    # probs stream outside so the kernel stays trace-safe.
    if isinstance(scale, (int, float)):
        static_scale = float(scale)
    else:
        probs_nchw = probs_nchw * scale
        static_scale = 1.0

    # Contiguous reshapes only — no transposes in the wrapper.
    feats = feats_nchw.reshape(B, C, HW)
    probs = probs_nchw.reshape(B, K, HW)

    # bf16 feats stream goes straight to the MXU; otherwise compute in f32.
    mm_dtype = jnp.bfloat16 if feats.dtype == jnp.bfloat16 else jnp.float32
    mm_itemsize = jnp.dtype(mm_dtype).itemsize
    approx_recip = mm_dtype == jnp.bfloat16   # exact reciprocal on the f32 path

    # --- Per-generation VMEM budget --------------------------------------
    vmem_cap = _vmem_capacity_bytes()                  # 128 MiB v5e/v6e, 64 MiB v7x
    vmem_limit = max(32 << 20, int(vmem_cap * 0.80))   # ~102 MiB / ~51 MiB
    vmem_limit = min(vmem_limit, vmem_cap)

    probs_bytes = 2 * K * HW * jnp.dtype(probs.dtype).itemsize   # double-buffered in
    scratch_bytes = K * HW * mm_itemsize                          # cached softmax
    temps_bytes = 3 * K * HW * 4                                   # f32 softmax temps
    headroom = 2 << 20                                             # out dbl-buf + misc
    feats_itemsize = jnp.dtype(feats.dtype).itemsize
    feats_budget = vmem_limit - probs_bytes - scratch_bytes - temps_bytes - headroom
    feats_budget = max(feats_budget, 2 * 8 * HW * feats_itemsize)
    # TODO(synk): for extreme HW (>= ~2^17) on v7x, an inner HW grid axis with an
    # online softmax would decouple the feats tile from HW; not needed for HRNet-OCR.

    c_blk, c_pad = _choose_c_block(C, HW, feats_itemsize, feats_budget)
    if c_pad != C:
        feats = jnp.pad(feats, ((0, 0), (0, c_pad - C), (0, 0)))
    n_c = c_pad // c_blk

    kern = functools.partial(_spatial_gather_kernel,
                             scale=static_scale, approx_recip=approx_recip)

    out = pl.pallas_call(
        kern,
        out_shape=jax.ShapeDtypeStruct((B, c_pad, K), jnp.float32),
        grid=(B, n_c),
        in_specs=[
            # probs block index is constant over the C axis -> resident in VMEM.
            pl.BlockSpec((1, K, HW), lambda b, c: (b, 0, 0)),
            pl.BlockSpec((1, c_blk, HW), lambda b, c: (b, c, 0)),
        ],
        out_specs=pl.BlockSpec((1, c_blk, K), lambda b, c: (b, c, 0)),
        scratch_shapes=[pltpu.VMEM((K, HW), mm_dtype)],
        compiler_params=pltpu.CompilerParams(
            # The C axis carries the cached softmax -> must stay "arbitrary".
            # TODO(synk): for B == 1 on v7x (2 TCs) one could instead split the C
            # axis across cores with per-core softmax recompute to avoid idling.
            dimension_semantics=("parallel", "arbitrary"),
            vmem_limit_bytes=vmem_limit),
        cost_estimate=pl.CostEstimate(
            flops=2 * B * C * K * HW,
            transcendentals=B * K * HW,
            bytes_accessed=int(feats.size) * feats_itemsize
                           + int(probs.size) * jnp.dtype(probs.dtype).itemsize
                           + B * C * K * 4),
    )(probs, feats)

    return out[:, :C, :] if c_pad != C else out


if __name__ == "__main__":
    # Small, module-consistent shapes: B=2 images, C=64 feature channels,
    # K=8 classes, 16x16 spatial (HW=256).
    B, C, K, H, W = 2, 64, 8, 16, 16
    SCALE = 1.0

    key = jax.random.PRNGKey(0)
    kf, kp = jax.random.split(key)
    feats = jax.random.normal(kf, (B, C, H, W), dtype=jnp.float32)
    probs = jax.random.normal(kp, (B, K, H, W), dtype=jnp.float32)

    out = spatial_gather(feats, probs, scale=SCALE)
    out = jax.block_until_ready(out)

    # Pure-JAX reference (mirrors the PyTorch module exactly).
    p_ref = jax.nn.softmax(SCALE * probs.reshape(B, K, H * W), axis=-1)
    f_ref = feats.reshape(B, C, H * W)
    ref = jnp.einsum('bkn,bcn->bck', p_ref, f_ref)

    assert out.shape == (B, C, K), out.shape
    assert bool(jnp.all(jnp.isfinite(out)))
    assert bool(jnp.allclose(out, ref, atol=1e-5, rtol=1e-5))
    print("KERNEL_OK")
</pallas_src>

<mosaic_0001>
module attributes {stable_mosaic.version = 11 : i64} {
  func.func @_spatial_gather_kernel(%arg0: i32, %arg1: i32, %arg2: memref<1x8x256xf32, #tpu.memory_space<vmem>>, %arg3: memref<1x64x256xf32, #tpu.memory_space<vmem>>, %arg4: memref<1x64x8xf32, #tpu.memory_space<vmem>>, %arg5: memref<8x256xf32, #tpu.memory_space<vmem>>) attributes {dimension_semantics = [#tpu.dimension_semantics<parallel>, #tpu.dimension_semantics<arbitrary>], iteration_bounds = array<i64: 2, 1>, scalar_prefetch = 0 : i64, scratch_operands = 1 : i64, tpu.core_type = #tpu.core_type<tc>, window_params = [{transform_indices = @transform_0, window_bounds = array<i64: 1, 8, 256>}, {transform_indices = @transform_1, window_bounds = array<i64: 1, 64, 256>}, {transform_indices = @transform_2, window_bounds = array<i64: 1, 64, 8>}]} {
    %c0_i32 = arith.constant 0 : i32
    %0 = arith.cmpi eq, %arg1, %c0_i32 : i32
    %1 = arith.extui %0 : i1 to i32
    %c0_i32_0 = arith.constant 0 : i32
    %2 = arith.cmpi ne, %1, %c0_i32_0 : i32
    scf.if %2 {
      %c0_8 = arith.constant 0 : index
      %c0_9 = arith.constant 0 : index
      %c0_10 = arith.constant 0 : index
      %10 = vector.load %arg2[%c0_8, %c0_9, %c0_10] : memref<1x8x256xf32, #tpu.memory_space<vmem>>, vector<1x8x256xf32>
      %11 = vector.shape_cast %10 : vector<1x8x256xf32> to vector<8x256xf32>
      %cst_11 = arith.constant dense<0xFF800000> : vector<8xf32>
      %12 = vector.multi_reduction <maximumf>, %11, %cst_11 [1] : vector<8x256xf32> to vector<8xf32>
      %13 = vector.shape_cast %12 : vector<8xf32> to vector<8x1xf32>
      %14 = vector.broadcast %13 : vector<8x1xf32> to vector<8x256xf32>
      %15 = arith.subf %11, %14 : vector<8x256xf32>
      %16 = math.exp %15 : vector<8x256xf32>
      %cst_12 = arith.constant dense<0.000000e+00> : vector<8xf32>
      %17 = vector.multi_reduction <add>, %16, %cst_12 [1] : vector<8x256xf32> to vector<8xf32>
      %18 = vector.shape_cast %17 : vector<8xf32> to vector<8x1xf32>
      %19 = tpu.reciprocal %18 : vector<8x1xf32> -> vector<8x1xf32>
      %20 = vector.broadcast %19 : vector<8x1xf32> to vector<8x256xf32>
      %21 = arith.mulf %16, %20 : vector<8x256xf32>
      %c0_13 = arith.constant 0 : index
      %c0_14 = arith.constant 0 : index
      %22 = vector.load %arg5[%c0_13, %c0_14] : memref<8x256xf32, #tpu.memory_space<vmem>>, vector<8x256xf32>
      tpu.vector_store %arg5[%c0_13, %c0_14], %21 {strides = array<i32>} : memref<8x256xf32, #tpu.memory_space<vmem>>, vector<8x256xf32>,
    } else {
    }
    %c0 = arith.constant 0 : index
    %c0_1 = arith.constant 0 : index
    %3 = vector.load %arg5[%c0, %c0_1] : memref<8x256xf32, #tpu.memory_space<vmem>>, vector<8x256xf32>
    %c0_2 = arith.constant 0 : index
    %c0_3 = arith.constant 0 : index
    %c0_4 = arith.constant 0 : index
    %4 = vector.load %arg3[%c0_2, %c0_3, %c0_4] : memref<1x64x256xf32, #tpu.memory_space<vmem>>, vector<1x64x256xf32>
    %5 = vector.shape_cast %4 : vector<1x64x256xf32> to vector<64x256xf32>
    %cst = arith.constant dense<0.000000e+00> : vector<64x8xf32>
    %6 = tpu.matmul %5, %3, %cst {dimension_numbers = #tpu.dot_dimension_numbers<[1], [1], [0], [0], [0, 0, 1, 0], [], []>} : vector<64x256xf32>, vector<8x256xf32>, vector<64x8xf32> -> vector<64x8xf32>
    %c0_5 = arith.constant 0 : index
    %c0_6 = arith.constant 0 : index
    %c0_7 = arith.constant 0 : index
    %7 = vector.load %arg4[%c0_5, %c0_6, %c0_7] : memref<1x64x8xf32, #tpu.memory_space<vmem>>, vector<1x64x8xf32>
    %8 = vector.shape_cast %7 : vector<1x64x8xf32> to vector<64x8xf32>
    %9 = vector.shape_cast %6 : vector<64x8xf32> to vector<1x64x8xf32>
    tpu.vector_store %arg4[%c0_5, %c0_6, %c0_7], %9 {strides = array<i32>} : memref<1x64x8xf32, #tpu.memory_space<vmem>>, vector<1x64x8xf32>,
    return
  }
  func.func @transform_0(%arg0: i32, %arg1: i32) -> (i32, i32, i32) {
    %c0_i32 = arith.constant 0 : i32
    %c0_i32_0 = arith.constant 0 : i32
    %c0_i32_1 = arith.constant 0 : i32
    return %arg0, %c0_i32, %c0_i32_0 : i32, i32, i32
  }
  func.func @transform_1(%arg0: i32, %arg1: i32) -> (i32, i32, i32) {
    %c0_i32 = arith.constant 0 : i32
    %c0_i32_0 = arith.constant 0 : i32
    return %arg0, %arg1, %c0_i32 : i32, i32, i32
  }
  func.func @transform_2(%arg0: i32, %arg1: i32) -> (i32, i32, i32) {
    %c0_i32 = arith.constant 0 : i32
    %c0_i32_0 = arith.constant 0 : i32
    return %arg0, %arg1, %c0_i32 : i32, i32, i32
  }
}

</mosaic_0001>

<llo_original>
// kernel: tpu_custom_call.1
$region0: #{tpu_custom_call.1}
  #allocation0 [shape = 'u32[]', space=smem, size = 0x4, offset = 0x4, fixed_abs, tag = 'smem constant byte address 0x4 - core index']
  #allocation1 [shape = 'u32[144,128]{1,0:T(1,128)}', space=vmem, size = 0x12000, scoped, tag = 'internal scratch']
  #allocation2 [shape = 'f32[8,256]{1,0:T(8,128)}', space=vmem, size = 0x2000, scoped, tag = 'scratch operand']
  %s0 = inlined_call_operand.hbm [shape: f32[2,8,256], index: 0, kind: input, shape index: {}]
  %s1 = inlined_call_operand.hbm [shape: f32[2,64,256], index: 1, kind: input, shape index: {}]
  %s2 = inlined_call_operand.vmem [shape: f32[2,64,8], index: 2, kind: output, shape index: {}]
  %s3 = sld [smem:[#allocation0]]
  $region53: #{tpu_custom_call.1} parent=0
    _
  %s5 = ssub.s32 1, %s3
  %s6 = scalar_select 0, %s5, %s3
  $region1: #{tpu_custom_call.1} parent=0
    #allocation3 [shape = 'u8[16384]{0}', space=vmem, size = 0x4000, scoped, tag = 'input window, operand 0']
    #allocation4 [shape = 's32[2]{0}', space=sflag, size = 0x8, scoped, tag = 'scoped memory for tpu_custom_call.1']
    #allocation5 [shape = 'u8[131072]{0}', space=vmem, size = 0x20000, scoped, tag = 'input window, operand 1']
    #allocation6 [shape = 's32[2]{0}', space=sflag, size = 0x8, scoped, tag = 'scoped memory for tpu_custom_call.1']
    %7 = vsyncpa [#allocation4], 0
    %s8 = scalar_lea.sflag [#allocation4], 1
    %9 = vsyncpa %s8, 0
    %10 = vsyncpa [#allocation6], 0
    %s11 = scalar_lea.sflag [#allocation6], 1
    %12 = vsyncpa %s11, 0
    loop: start=0, step=1, limit=4
    $region2: #{tpu_custom_call.1} parent=1 // loop_pre_header
      _
    $region3: #{tpu_custom_call.1} parent=1 // loop_header
      %s14 = sphi 0, %s18
      %p15 = scmp.ge.s32.totalorder %s14, 4
      %s21 = sphi 0, %s33
      %s22 = sphi 0, %s29
      %s23 = sphi 0, %s21
      %s24 = sphi 0, %s22
      %s25 = sphi 0, %s23
      %s26 = sphi 0, %s24
      %s36 = sphi 0, %s38
      %s39 = sphi 0, %s36
      %s40 = sphi 0, %s39
      %s56 = sphi 0, %s40
      %s64 = sphi 0, %s66
      %s67 = sphi 0, %s64
      %s68 = sphi 0, %s67
      %s84 = sphi 0, %s68
      %s92 = sphi 0, %s94
      %s95 = sphi 0, %s92
      %s96 = sphi 0, %s95
      %s112 = sphi 0, %s96
    $region4: #{tpu_custom_call.1} parent=1 // loop_header_branch
      %17 = sbr.rel (%p15) target = $region8
    $region5: #{tpu_custom_call.1} parent=1 // loop_body
      %s19 = ssub.s32 %s14, 1
      %s20 = ssub.s32 %s14, 2
      %s27 = sadd.s32 1, %s22
      %p28 = scmp.ge.s32.totalorder %s27, 1
      %s29 = scalar_select %p28, 0, %s27
      %s30 = sadd.s32 1, %s21
      %s31 = scalar_select %p28, %s30, %s21
      %p32 = scmp.ge.s32.totalorder %s31, 2
      %s33 = scalar_select %p32, 0, %s31
      %s34 = ssub.s32 %s21, %s33
      %p35 = scmp.eq.s32.totalorder %s34, 0
      %s37 = sadd.s32 %s36, 1
      %s38 = scalar_select %p35, %s36, %s37
      %p41 = pneg %p35
      %p42 = scmp.eq.s32.totalorder %s14, 1
      %p43 = por %p41, %p42
      %p44 = scmp.ne.s32.totalorder %s36, %s39
      %p45 = scmp.eq.s32.totalorder %s14, 0
      %p46 = por %p44, %p45
      %p47 = scmp.ne.s32.totalorder %s36, %s39
      %p48 = scmp.eq.s32.totalorder %s19, 1
      %p49 = por %p47, %p48
      %p50 = scmp.ne.s32.totalorder %s39, %s40
      %p51 = scmp.eq.s32.totalorder %s19, 0
      %p52 = por %p50, %p51
      %p53 = scmp.ne.s32.totalorder %s39, %s40
      %p54 = scmp.eq.s32.totalorder %s20, 1
      %p55 = por %p53, %p54
      %p57 = scmp.ne.s32.totalorder %s40, %s56
      %p58 = scmp.eq.s32.totalorder %s20, 0
      %p59 = por %p57, %p58
      %s60 = ssub.s32 %s21, %s33
      %s61 = ssub.s32 %s22, %s29
      %s62 = sor.u32 %s60, %s61
      %p63 = scmp.eq.s32.totalorder %s62, 0
      %s65 = sadd.s32 %s64, 1
      %s66 = scalar_select %p63, %s64, %s65
      %p69 = pneg %p63
      %p70 = scmp.eq.s32.totalorder %s14, 1
      %p71 = por %p69, %p70
      %p72 = scmp.ne.s32.totalorder %s64, %s67
      %p73 = scmp.eq.s32.totalorder %s14, 0
      %p74 = por %p72, %p73
      %p75 = scmp.ne.s32.totalorder %s64, %s67
      %p76 = scmp.eq.s32.totalorder %s19, 1
      %p77 = por %p75, %p76
      %p78 = scmp.ne.s32.totalorder %s67, %s68
      %p79 = scmp.eq.s32.totalorder %s19, 0
      %p80 = por %p78, %p79
      %p81 = scmp.ne.s32.totalorder %s67, %s68
      %p82 = scmp.eq.s32.totalorder %s20, 1
      %p83 = por %p81, %p82
      %p85 = scmp.ne.s32.totalorder %s68, %s84
      %p86 = scmp.eq.s32.totalorder %s20, 0
      %p87 = por %p85, %p86
      %s88 = ssub.s32 %s21, %s33
      %s89 = ssub.s32 %s22, %s29
      %s90 = sor.u32 %s88, %s89
      %p91 = scmp.eq.s32.totalorder %s90, 0
      %s93 = sadd.s32 %s92, 1
      %s94 = scalar_select %p91, %s92, %s93
      %p97 = pneg %p91
      %p98 = scmp.eq.s32.totalorder %s14, 1
      %p99 = por %p97, %p98
      %p100 = scmp.ne.s32.totalorder %s92, %s95
      %p101 = scmp.eq.s32.totalorder %s14, 0
      %p102 = por %p100, %p101
      %p103 = scmp.ne.s32.totalorder %s92, %s95
      %p104 = scmp.eq.s32.totalorder %s19, 1
      %p105 = por %p103, %p104
      %p106 = scmp.ne.s32.totalorder %s95, %s96
      %p107 = scmp.eq.s32.totalorder %s19, 0
      %p108 = por %p106, %p107
      %p109 = scmp.ne.s32.totalorder %s95, %s96
      %p110 = scmp.eq.s32.totalorder %s20, 1
      %p111 = por %p109, %p110
      %p113 = scmp.ne.s32.totalorder %s96, %s112
      %p114 = scmp.eq.s32.totalorder %s20, 0
      %p115 = por %p113, %p114
      %p116 = scmp.le.s32.totalorder 1, %s14
      %p117 = scmp.lt.s32.totalorder %s14, 3
      %p118 = pnand %p116, %p117
      %p119 = pneg %p118
      // Predicated region
      $region9: #{tpu_custom_call.1} parent=5 // pred_check
        _
      $region10: #{tpu_custom_call.1} parent=5 // pred_check_branch
        %121 = sbr.rel (%p118) target = $region12
      $region11: #{tpu_custom_call.1} parent=5 // pred_region
        %s122 = ssub.s32 %s14, 1
      $region12: #{tpu_custom_call.1} parent=5 // pred_fallthru
        _
      %p123 = scmp.lt.s32.totalorder %s14, 2
      // Predicated region
      $region13: #{tpu_custom_call.1} parent=5 // pred_check
        %p124 = pneg %p123
      $region14: #{tpu_custom_call.1} parent=5 // pred_check_branch
        %126 = sbr.rel (%p124) target = $region16
      $region15: #{tpu_custom_call.1} parent=5 // pred_region
        // Predicated region
        $region17: #{tpu_custom_call.1} parent=15 // pred_check
          %p127 = pneg %p46
        $region18: #{tpu_custom_call.1} parent=15 // pred_check_branch
          %129 = sbr.rel (%p127) target = $region20
        $region19: #{tpu_custom_call.1} parent=15 // pred_region
          %s130 = sand.u32 %s36, 1
          %s131 = scalar_lea.sflag [#allocation4], %s130
          %s132 = sand.u32 %s36, 1
          %s133 = smul.addr %s132, 16
          %s134 = scalar_lea.vmem [#allocation3], %s133
          %s136 = ssub.s32 256, 256
          %137 = vsyncadd %s131, %s136
          %s138 = smul.addr %s21, 2
          %s139 = smul.addr %s138, 128
          %s140 = scalar_lea.hbm %s0, %s139
          %s142 = sshll.u32 %s134, 4
          %s143 = int_to_ptr.vmem [resolvable:$true] %s142
          %145 = dma.hbm_to_vmem [thread:$0]  %s140, 256, %s143, %s131
        $region20: #{tpu_custom_call.1} parent=15 // pred_fallthru
          _
        // Predicated region
        $region21: #{tpu_custom_call.1} parent=15 // pred_check
          %p146 = pneg %p74
        $region22: #{tpu_custom_call.1} parent=15 // pred_check_branch
          %148 = sbr.rel (%p146) target = $region24
        $region23: #{tpu_custom_call.1} parent=15 // pred_region
          %s149 = sand.u32 %s64, 1
          %s150 = scalar_lea.sflag [#allocation6], %s149
          %s151 = sand.u32 %s64, 1
          %s152 = smul.addr %s151, 128
          %s153 = scalar_lea.vmem [#allocation5], %s152
          %s154 = smul.u32 8, %s22
          %s156 = ssub.s32 2048, 2048
          %157 = vsyncadd %s150, %s156
          %s158 = smul.addr %s154, 2
          %s159 = smul.addr %s21, 16
          %s160 = sadd.s32 %s158, %s159
          %s161 = smul.addr %s160, 128
          %s162 = scalar_lea.hbm %s1, %s161
          %s163 = sshll.u32 %s153, 4
          %s164 = int_to_ptr.vmem [resolvable:$true] %s163
          %169 = dma.hbm_to_vmem [thread:$0]  %s162, 2048, %s164, %s150, 256, 256, 16
        $region24: #{tpu_custom_call.1} parent=15 // pred_fallthru
          _
      $region16: #{tpu_custom_call.1} parent=5 // pred_fallthru
        _
      %p170 = scmp.le.s32.totalorder 1, %s14
      %p171 = scmp.lt.s32.totalorder %s14, 3
      %p172 = pnand %p170, %p171
      %p173 = pneg %p172
      // Predicated region
      $region25: #{tpu_custom_call.1} parent=5 // pred_check
        _
      $region26: #{tpu_custom_call.1} parent=5 // pred_check_branch
        %175 = sbr.rel (%p172) target = $region28
      $region27: #{tpu_custom_call.1} parent=5 // pred_region
        %s176 = ssub.s32 %s14, 1
        %s177 = sand.u32 %s39, 1
        %s178 = scalar_lea.sflag [#allocation4], %s177
        %s179 = sand.u32 %s39, 1
        %s180 = smul.addr %s179, 16
        %s181 = scalar_lea.vmem [#allocation3], %s180
        // Predicated region
        $region29: #{tpu_custom_call.1} parent=27 // pred_check
          %p182 = pneg %p52
        $region30: #{tpu_custom_call.1} parent=27 // pred_check_branch
          %184 = sbr.rel (%p182) target = $region32
        $region31: #{tpu_custom_call.1} parent=27 // pred_region
          %185 = dma.done %s178, 256
        $region32: #{tpu_custom_call.1} parent=27 // pred_fallthru
          _
        %s186 = sand.u32 %s67, 1
        %s187 = scalar_lea.sflag [#allocation6], %s186
        %s188 = sand.u32 %s67, 1
        %s189 = smul.addr %s188, 128
        %s190 = scalar_lea.vmem [#allocation5], %s189
        // Predicated region
        $region33: #{tpu_custom_call.1} parent=27 // pred_check
          %p191 = pneg %p80
        $region34: #{tpu_custom_call.1} parent=27 // pred_check_branch
          %193 = sbr.rel (%p191) target = $region36
        $region35: #{tpu_custom_call.1} parent=27 // pred_region
          %194 = dma.done %s187, 2048
        $region36: #{tpu_custom_call.1} parent=27 // pred_fallthru
          _
        %s195 = sand.u32 %s39, 1
        %s196 = scalar_lea.sflag [#allocation4], %s195
        %s197 = sand.u32 %s39, 1
        %s198 = smul.addr %s197, 16
        %s199 = scalar_lea.vmem [#allocation3], %s198
        %p200 = pneg %p52
        %p201 = pneg %p49
        %s202 = sand.u32 %s67, 1
        %s203 = scalar_lea.sflag [#allocation6], %s202
        %s204 = sand.u32 %s67, 1
        %s205 = smul.addr %s204, 128
        %s206 = scalar_lea.vmem [#allocation5], %s205
        %p207 = pneg %p80
        %p208 = pneg %p77
        %p209 = pneg %p108
        %p210 = pneg %p105
        %s211 = smul.u32 8, %s24
        %p212 = scmp.lt.s32.totalorder %s23, 1
        %s213 = scalar_select %p212, %s23, 1
        %p214 = scmp.lt.s32.totalorder %s211, 7
        %s215 = scalar_select %p214, %s211, 7
        %s216 = smul.addr %s213, 8
        %s217 = sadd.s32 %s215, %s216
        %s218 = smul.addr %s217, 8
        %s219 = scalar_lea.vmem %s2, %s218
        %s220 = smul.u32 8, %s24
        %s221 = smul.u32 8, %s24
        %p222 = scmp.lt.s32.totalorder %s23, 1
        %s223 = scalar_select %p222, %s23, 1
        %p224 = scmp.lt.s32.totalorder %s221, 7
        %s225 = scalar_select %p224, %s221, 7
        %s226 = smul.addr %s223, 8
        %s227 = sadd.s32 %s225, %s226
        %s228 = smul.addr %s227, 8
        %s229 = scalar_lea.vmem %s2, %s228
        %s230 = smul.u32 8, %s24
        %p231 = scmp.eq.s32.totalorder %s24, 0
        // Predicated region
        $region37: #{tpu_custom_call.1} parent=27 // pred_check
          %p232 = pneg %p231
        $region38: #{tpu_custom_call.1} parent=27 // pred_check_branch
          %234 = sbr.rel (%p232) target = $region40
        $region39: #{tpu_custom_call.1} parent=27 // pred_region
          %v235 = vld [vmem:[%s181] sm:$0xff]
          %v236 = vld [vmem:[%s181 + $0x8] sm:$0xff]
          %v237 = vmax.f32 %v235, %v236
          %238 = vmax.xlane.f32.xlu0 %v237
          %v239 = vpop.xlane.xlu0 %238
          %v240 = vsub.f32 %v235, %v239
          %v241 = vsub.f32 %v236, %v239
          %v242 = vmul.f32 %v240, 1.442695
          %v243 = vpow.pop %v242
          %v244 = vmul.f32 %v241, 1.442695
          %v245 = vpow.pop %v244
          %v246 = vadd.f32 %v243, %v245
          %247 = vadd.xlane.f32.xlu0 %v246
          %v248 = vpop.xlane.xlu0 %247
          %v249 = vrcp.pop %v248
          %v250 = vmul.f32 %v243, %v249
          %v251 = vmul.f32 %v245, %v249
          %252 = vst [vmem:[#allocation2] sm:$0xff] %v250
          %253 = vst [vmem:[#allocation2 + $0x8] sm:$0xff] %v251
        $region40: #{tpu_custom_call.1} parent=27 // pred_fallthru
          _
        %v254 = vld [vmem:[#allocation2] sm:$0xff]
        %v255 = vld [vmem:[#allocation2 + $0x8] sm:$0xff]
        %v256 = vld [vmem:[%s190] sm:$0xff]
        %v257 = vld [vmem:[%s190 + $0x8] sm:$0xff]
        %v258 = vld [vmem:[%s190 + $0x10] sm:$0xff]
        %v259 = vld [vmem:[%s190 + $0x18] sm:$0xff]
        %v260 = vld [vmem:[%s190 + $0x20] sm:$0xff]
        %v261 = vld [vmem:[%s190 + $0x28] sm:$0xff]
        %v262 = vld [vmem:[%s190 + $0x30] sm:$0xff]
        %v263 = vld [vmem:[%s190 + $0x38] sm:$0xff]
        %v264 = vld [vmem:[%s190 + $0x40] sm:$0xff]
        %v265 = vld [vmem:[%s190 + $0x48] sm:$0xff]
        %v266 = vld [vmem:[%s190 + $0x50] sm:$0xff]
        %v267 = vld [vmem:[%s190 + $0x58] sm:$0xff]
        %v268 = vld [vmem:[%s190 + $0x60] sm:$0xff]
        %v269 = vld [vmem:[%s190 + $0x68] sm:$0xff]
        %v270 = vld [vmem:[%s190 + $0x70] sm:$0xff]
        %v271 = vld [vmem:[%s190 + $0x78] sm:$0xff]
        %272 = vmatprep.subr.mxu0 0.0
        %273 = vmatpush1.xpose.msra.mxu0 0.0
        %274 = vmatprep.subr.mxu0 0.0
        %275 = vmatpush1.xpose.msra.mxu0 0.0
        %276 = vmatprep.subr.mxu0 0.0
        %277 = vmatpush1.xpose.msra.mxu0 0.0
        %278 = vmatprep.subr.mxu0 0.0
        %279 = vmatpush1.xpose.msra.mxu0 0.0
        %280 = vmatprep.subr.mxu0 0.0
        %281 = vmatpush1.xpose.msra.mxu0 0.0
        %282 = vmatprep.subr.mxu0 0.0
        %283 = vmatpush1.xpose.msra.mxu0 0.0
        %284 = vmatprep.subr.mxu0 0.0
        %285 = vmatpush1.xpose.msra.mxu0 0.0
        %286 = vmatprep.subr.mxu0 0.0
        %287 = vmatpush1.xpose.msra.mxu0 0.0
        %288 = vmatprep.subr.mxu0 0.0
        %289 = vmatpush1.xpose.msra.mxu0 0.0
        %290 = vmatprep.subr.mxu0 0.0
        %291 = vmatpush1.xpose.msra.mxu0 0.0
        %292 = vmatprep.subr.mxu0 0.0
        %293 = vmatpush1.xpose.msra.mxu0 0.0
        %294 = vmatprep.subr.mxu0 0.0
        %295 = vmatpush1.xpose.msra.mxu0 0.0
        %296 = vmatprep.subr.mxu0 0.0
        %297 = vmatpush1.xpose.msra.mxu0 0.0
        %298 = vmatprep.subr.mxu0 0.0
        %299 = vmatpush1.xpose.msra.mxu0 0.0
        %300 = vmatprep.subr.mxu0 0.0
        %301 = vmatpush1.xpose.msra.mxu0 0.0
        %302 = vmatprep.subr.mxu0 %v255
        %303 = vmatpush1.xpose.msra.mxu0 %v254
        %304 = vmatprep.subr.mxu0 0.0
        %305 = vmatpush2.xpose.msra.mxu0 0.0
        %306 = vmatprep.subr.mxu0 0.0
        %307 = vmatpush2.xpose.msra.mxu0 0.0
        %308 = vmatprep.subr.mxu0 0.0
        %309 = vmatpush2.xpose.msra.mxu0 0.0
        %310 = vmatprep.subr.mxu0 0.0
        %311 = vmatpush2.xpose.msra.mxu0 0.0
        %312 = vmatprep.subr.mxu0 0.0
        %313 = vmatpush2.xpose.msra.mxu0 0.0
        %314 = vmatprep.subr.mxu0 0.0
        %315 = vmatpush2.xpose.msra.mxu0 0.0
        %316 = vmatprep.subr.mxu0 0.0
        %317 = vmatpush2.xpose.msra.mxu0 0.0
        %318 = vmatprep.subr.mxu0 0.0
        %319 = vmatpush2.xpose.msra.mxu0 0.0
        %320 = vmatprep.subr.mxu0 0.0
        %321 = vmatpush2.xpose.msra.mxu0 0.0
        %322 = vmatprep.subr.mxu0 0.0
        %323 = vmatpush2.xpose.msra.mxu0 0.0
        %324 = vmatprep.subr.mxu0 0.0
        %325 = vmatpush2.xpose.msra.mxu0 0.0
        %326 = vmatprep.subr.mxu0 0.0
        %327 = vmatpush2.xpose.msra.mxu0 0.0
        %328 = vmatprep.subr.mxu0 0.0
        %329 = vmatpush2.xpose.msra.mxu0 0.0
        %330 = vmatprep.subr.mxu0 0.0
        %331 = vmatpush2.xpose.msra.mxu0 0.0
        %332 = vmatprep.subr.mxu0 0.0
        %333 = vmatpush2.xpose.msra.mxu0 0.0
        %334 = vmatprep.subr.mxu0 0.0
        %335 = vmatpush2.xpose.msra.mxu0 0.0
        %336 = vmatprep.mubr.f32.mxu0 %v257
        %337 = vmatmul.mubr.f32.gmra.mxu0 %v256
        %v338 = vpop.f32.mrf.mxu0
        %v339 = vadd.f32 0.0, %v338
        %v340 = vpop.f32.mrf.mxu0
        %341 = vmatprep.mubr.f32.mxu0 %v259
        %342 = vmatmul.mubr.f32.gmra.mxu0 %v258
        %v343 = vpop.f32.mrf.mxu0
        %v344 = vadd.f32 0.0, %v343
        %v345 = vpop.f32.mrf.mxu0
        %346 = vmatprep.mubr.f32.mxu0 %v261
        %347 = vmatmul.mubr.f32.gmra.mxu0 %v260
        %v348 = vpop.f32.mrf.mxu0
        %v349 = vadd.f32 0.0, %v348
        %v350 = vpop.f32.mrf.mxu0
        %351 = vmatprep.mubr.f32.mxu0 %v263
        %352 = vmatmul.mubr.f32.gmra.mxu0 %v262
        %v353 = vpop.f32.mrf.mxu0
        %v354 = vadd.f32 0.0, %v353
        %v355 = vpop.f32.mrf.mxu0
        %356 = vmatprep.mubr.f32.mxu0 %v265
        %357 = vmatmul.mubr.f32.gmra.mxu0 %v264
        %v358 = vpop.f32.mrf.mxu0
        %v359 = vadd.f32 0.0, %v358
        %v360 = vpop.f32.mrf.mxu0
        %361 = vmatprep.mubr.f32.mxu0 %v267
        %362 = vmatmul.mubr.f32.gmra.mxu0 %v266
        %v363 = vpop.f32.mrf.mxu0
        %v364 = vadd.f32 0.0, %v363
        %v365 = vpop.f32.mrf.mxu0
        %366 = vmatprep.mubr.f32.mxu0 %v269
        %367 = vmatmul.mubr.f32.gmra.mxu0 %v268
        %v368 = vpop.f32.mrf.mxu0
        %v369 = vadd.f32 0.0, %v368
        %v370 = vpop.f32.mrf.mxu0
        %371 = vmatprep.mubr.f32.mxu0 %v271
        %372 = vmatmul.mubr.f32.gmra.mxu0 %v270
        %v373 = vpop.f32.mrf.mxu0
        %v374 = vadd.f32 0.0, %v373
        %v375 = vpop.f32.mrf.mxu0
        %376 = vdwg.mxu0
        %vm377 = vcmask 64512
        %378 = vst.msk [vmem:[%s229] sm:$0xff] %vm377, %v339
        %379 = vst.msk [vmem:[%s229 + $0x8] sm:$0xff] %vm377, %v344
        %380 = vst.msk [vmem:[%s229 + $0x10] sm:$0xff] %vm377, %v349
        %381 = vst.msk [vmem:[%s229 + $0x18] sm:$0xff] %vm377, %v354
        %382 = vst.msk [vmem:[%s229 + $0x20] sm:$0xff] %vm377, %v359
        %383 = vst.msk [vmem:[%s229 + $0x28] sm:$0xff] %vm377, %v364
        %384 = vst.msk [vmem:[%s229 + $0x30] sm:$0xff] %vm377, %v369
        %385 = vst.msk [vmem:[%s229 + $0x38] sm:$0xff] %vm377, %v374
        %s386 = smul.u32 8, %s24
        %p387 = scmp.lt.s32.totalorder %s23, 1
        %s388 = scalar_select %p387, %s23, 1
        %p389 = scmp.lt.s32.totalorder %s386, 7
        %s390 = scalar_select %p389, %s386, 7
        %s391 = smul.addr %s388, 8
        %s392 = sadd.s32 %s390, %s391
        %s393 = smul.addr %s392, 8
        %s394 = scalar_lea.vmem %s2, %s393
        // Predicated region
        $region41: #{tpu_custom_call.1} parent=27 // pred_check
          %p395 = pneg %p105
        $region42: #{tpu_custom_call.1} parent=27 // pred_check_branch
          %397 = sbr.rel (%p395) target = $region44
        $region43: #{tpu_custom_call.1} parent=27 // pred_region
          %s398 = smul.u32 8, %s24
        $region44: #{tpu_custom_call.1} parent=27 // pred_fallthru
          _
      $region28: #{tpu_custom_call.1} parent=5 // pred_fallthru
        _
      %p399 = scmp.le.s32.totalorder 2, %s14
      // Predicated region
      $region45: #{tpu_custom_call.1} parent=5 // pred_check
        %p400 = pneg %p399
      $region46: #{tpu_custom_call.1} parent=5 // pred_check_branch
        %402 = sbr.rel (%p400) target = $region48
      $region47: #{tpu_custom_call.1} parent=5 // pred_region
        %s403 = ssub.s32 %s14, 2
        // Predicated region
        $region49: #{tpu_custom_call.1} parent=47 // pred_check
          %p404 = pneg %p111
        $region50: #{tpu_custom_call.1} parent=47 // pred_check_branch
          %406 = sbr.rel (%p404) target = $region52
        $region51: #{tpu_custom_call.1} parent=47 // pred_region
          %s407 = smul.u32 8, %s26
          %p408 = scmp.lt.s32.totalorder %s25, 1
          %s409 = scalar_select %p408, %s25, 1
          %p410 = scmp.lt.s32.totalorder %s407, 7
          %s411 = scalar_select %p410, %s407, 7
          %s412 = smul.addr %s409, 8
          %s413 = sadd.s32 %s411, %s412
          %s414 = smul.addr %s413, 8
          %s415 = scalar_lea.vmem %s2, %s414
        $region52: #{tpu_custom_call.1} parent=47 // pred_fallthru
          _
      $region48: #{tpu_custom_call.1} parent=5 // pred_fallthru
        _
    $region6: #{tpu_custom_call.1} parent=1 // loop_footer
      %s18 = sadd.s32 1, %s14
    $region7: #{tpu_custom_call.1} parent=1 // loop_footer_branch
      %13 = sbr.rel target = $region3
    $region8: #{tpu_custom_call.1} parent=1 // loop_exit
      _
    %416 = vsyncpa [#allocation4], 1
    %s417 = scalar_lea.sflag [#allocation4], 1
    %418 = vsyncpa %s417, 1
    %419 = vsyncpa [#allocation6], 1
    %s420 = scalar_lea.sflag [#allocation6], 1
    %421 = vsyncpa %s420, 1

</llo_original>
